<compile_context>
chip_gen: v7x
topology: tpu7x:2x2x1
jax: 0.10.0
libtpu: 0.0.40
codegen_flags: <defaults>
</compile_context>

<pallas_src>
import functools

import jax
import jax.numpy as jnp
from jax.experimental import pallas as pl
from jax.experimental.pallas import tpu as pltpu


def _round_up(x: int, m: int) -> int:
    return ((x + m - 1) // m) * m


def vprtempo_kernel(x_ref, w1_ref, w2_ref, out_ref):
    # Two MXU matmuls + IFNode thresholding (VPU compare), fused in one
    # VMEM-resident body. Operands are bf16; accumulation is f32.
    x = x_ref[...]
    h = jnp.dot(x, w1_ref[...], preferred_element_type=jnp.float32)
    # IFNode #1: v = 0 + h ; spike = (v >= v_threshold). 0/1 spikes are exact in bf16.
    s1 = (h >= 1.0).astype(w2_ref.dtype)
    o = jnp.dot(s1, w2_ref[...], preferred_element_type=jnp.float32)
    # IFNode #2.
    out_ref[...] = (o >= 1.0).astype(out_ref.dtype)


@functools.partial(jax.jit, static_argnames=("tb",))
def vprtempo_forward(x, w1_t, w2_t, *, tb: int = 256):
    """x: (B, D_in); w1_t: (D_in, D_feat); w2_t: (D_feat, D_out) -> (B, D_out) f32 spikes.

    Weights are the nn.Linear weights stored pre-transposed so the kernel
    computes y = x @ W (== x @ W_linear^T).
    """
    B, D_in = x.shape
    D_feat = w1_t.shape[1]
    D_out = w2_t.shape[1]

    cdtype = jnp.bfloat16

    # Pad feature dims to lane multiples (128) and batch to the tile size.
    # Zero padding is exact: padded contraction columns add 0.0 to the f32
    # accumulator, padded output columns / batch rows produce (0 >= 1) == 0
    # and are sliced off at the end.
    d_in_p = _round_up(D_in, 128)
    d_feat_p = _round_up(D_feat, 128)
    d_out_p = _round_up(D_out, 128)

    tb = min(int(tb), _round_up(B, 16))
    tb = _round_up(max(tb, 16), 16)          # bf16 packs 16 rows per sublane group
    b_p = _round_up(B, tb)
    grid = (b_p // tb,)

    x_p = jnp.zeros((b_p, d_in_p), cdtype).at[:B, :D_in].set(x.astype(cdtype))
    w1_p = jnp.zeros((d_in_p, d_feat_p), cdtype).at[:D_in, :D_feat].set(
        w1_t.astype(cdtype))
    w2_p = jnp.zeros((d_feat_p, d_out_p), cdtype).at[:D_feat, :D_out].set(
        w2_t.astype(cdtype))

    # Scoped VMEM budget: (conservatively) double-buffered weights plus
    # double-buffered x/out tiles, with margin, capped under v7x's 64 MiB
    # physical VMEM so the kernel also compiles there.
    needed = 2 * ((d_in_p * d_feat_p + d_feat_p * d_out_p) * 2
                  + tb * d_in_p * 2 + tb * d_out_p * 4)
    vmem_limit = int(min(60 * 1024 * 1024,
                         max(32 * 1024 * 1024, needed + 8 * 1024 * 1024)))

    out_p = pl.pallas_call(
        vprtempo_kernel,
        out_shape=jax.ShapeDtypeStruct((b_p, d_out_p), jnp.float32),
        grid_spec=pltpu.PrefetchScalarGridSpec(
            num_scalar_prefetch=0,
            grid=grid,
            in_specs=[
                # x: one batch tile per grid step (pipelined HBM->VMEM DMA).
                pl.BlockSpec((tb, d_in_p), lambda i: (i, 0)),
                # Weights: same block every step -> fetched once, VMEM-resident.
                pl.BlockSpec((d_in_p, d_feat_p), lambda i: (0, 0)),
                pl.BlockSpec((d_feat_p, d_out_p), lambda i: (0, 0)),
            ],
            out_specs=pl.BlockSpec((tb, d_out_p), lambda i: (i, 0)),
        ),
        compiler_params=pltpu.CompilerParams(
            # Batch tiles are independent: shard the grid across TensorCores.
            dimension_semantics=("parallel",),
            vmem_limit_bytes=vmem_limit,
        ),
    )(x_p, w1_p, w2_p)

    return out_p[:B, :D_out]


def reference_forward(x, w1_t, w2_t):
    # Same math in plain JAX (bf16 operands, f32 accumulation), for validation.
    h = jnp.dot(x.astype(jnp.bfloat16), w1_t.astype(jnp.bfloat16),
                preferred_element_type=jnp.float32)
    s1 = (h >= 1.0).astype(jnp.bfloat16)
    o = jnp.dot(s1, w2_t.astype(jnp.bfloat16),
                preferred_element_type=jnp.float32)
    return (o >= 1.0).astype(jnp.float32)


if __name__ == "__main__":
    # Shapes consistent with VPRTempo.__init__:
    #   dims = [8, 8] -> input = 64, feature = 2 * input = 128, output = out_dim.
    batch = 32                      # query images batched into one pallas_call
    dims = (8, 8)
    d_in = dims[0] * dims[1]        # 64
    d_feat = 2 * d_in               # 128
    d_out = 64                      # out_dim (synthetic)

    key = jax.random.PRNGKey(0)
    kx, k1, k2 = jax.random.split(key, 3)

    # Deterministic synthetic parameters (nn.Linear weights, stored transposed).
    # TODO(synk): real VPRTempo loads trained weights from a checkpoint; here
    # they are deterministic random initializations, stored bf16.
    x = jax.random.uniform(kx, (batch, d_in), dtype=jnp.float32).astype(jnp.bfloat16)
    w1_t = (jax.random.uniform(k1, (d_in, d_feat), dtype=jnp.float32) * 0.5
            ).astype(jnp.bfloat16)
    w2_t = (jax.random.uniform(k2, (d_feat, d_out), dtype=jnp.float32) * 0.1
            ).astype(jnp.bfloat16)

    # Small batch tile so the demo actually exercises a multi-step pipelined grid
    # (grid = (2,)); production default is tb=256.
    out = vprtempo_forward(x, w1_t, w2_t, tb=16)
    out = jax.block_until_ready(out)

    ref = reference_forward(x, w1_t, w2_t)
    assert out.shape == (batch, d_out), out.shape
    assert out.dtype == jnp.float32, out.dtype
    assert jnp.array_equal(out, ref), "Pallas output mismatch vs JAX reference"

    print("KERNEL_OK")
</pallas_src>

<mosaic_0001>
module attributes {stable_mosaic.version = 11 : i64} {
  func.func @vprtempo_kernel(%arg0: i32, %arg1: memref<16x128xbf16, #tpu.memory_space<vmem>>, %arg2: memref<128x128xbf16, #tpu.memory_space<vmem>>, %arg3: memref<128x128xbf16, #tpu.memory_space<vmem>>, %arg4: memref<16x128xf32, #tpu.memory_space<vmem>>) attributes {dimension_semantics = [#tpu.dimension_semantics<parallel>], iteration_bounds = array<i64: 2>, scalar_prefetch = 0 : i64, scratch_operands = 0 : i64, tpu.core_type = #tpu.core_type<tc>, window_params = [{transform_indices = @transform_0, window_bounds = array<i64: 16, 128>}, {pipeline_mode = #tpu.pipeline_mode<synchronous>, transform_indices = @transform_1, window_bounds = array<i64: 128, 128>}, {pipeline_mode = #tpu.pipeline_mode<synchronous>, transform_indices = @transform_2, window_bounds = array<i64: 128, 128>}, {transform_indices = @transform_3, window_bounds = array<i64: 16, 128>}]} {
    %c0 = arith.constant 0 : index
    %c0_0 = arith.constant 0 : index
    %0 = vector.load %arg1[%c0, %c0_0] : memref<16x128xbf16, #tpu.memory_space<vmem>>, vector<16x128xbf16>
    %c0_1 = arith.constant 0 : index
    %c0_2 = arith.constant 0 : index
    %1 = vector.load %arg2[%c0_1, %c0_2] : memref<128x128xbf16, #tpu.memory_space<vmem>>, vector<128x128xbf16>
    %cst = arith.constant dense<0.000000e+00> : vector<16x128xf32>
    %2 = tpu.matmul %0, %1, %cst {dimension_numbers = #tpu.dot_dimension_numbers<[1], [0], [0], [1], [0, 0, 1, 1], [], []>} : vector<16x128xbf16>, vector<128x128xbf16>, vector<16x128xf32> -> vector<16x128xf32>
    %cst_3 = arith.constant 1.000000e+00 : f32
    %3 = vector.broadcast %cst_3 : f32 to vector<16x128xf32>
    %4 = arith.cmpf oge, %2, %3 : vector<16x128xf32>
    %5 = arith.extui %4 : vector<16x128xi1> to vector<16x128xi32>
    %6 = arith.sitofp %5 : vector<16x128xi32> to vector<16x128xf32>
    %7 = arith.truncf %6 : vector<16x128xf32> to vector<16x128xbf16>
    %c0_4 = arith.constant 0 : index
    %c0_5 = arith.constant 0 : index
    %8 = vector.load %arg3[%c0_4, %c0_5] : memref<128x128xbf16, #tpu.memory_space<vmem>>, vector<128x128xbf16>
    %cst_6 = arith.constant dense<0.000000e+00> : vector<16x128xf32>
    %9 = tpu.matmul %7, %8, %cst_6 {dimension_numbers = #tpu.dot_dimension_numbers<[1], [0], [0], [1], [0, 0, 1, 1], [], []>} : vector<16x128xbf16>, vector<128x128xbf16>, vector<16x128xf32> -> vector<16x128xf32>
    %cst_7 = arith.constant 1.000000e+00 : f32
    %10 = vector.broadcast %cst_7 : f32 to vector<16x128xf32>
    %11 = arith.cmpf oge, %9, %10 : vector<16x128xf32>
    %12 = arith.extui %11 : vector<16x128xi1> to vector<16x128xi32>
    %13 = arith.sitofp %12 : vector<16x128xi32> to vector<16x128xf32>
    %c0_8 = arith.constant 0 : index
    %c0_9 = arith.constant 0 : index
    %14 = vector.load %arg4[%c0_8, %c0_9] : memref<16x128xf32, #tpu.memory_space<vmem>>, vector<16x128xf32>
    tpu.vector_store %arg4[%c0_8, %c0_9], %13 {strides = array<i32>} : memref<16x128xf32, #tpu.memory_space<vmem>>, vector<16x128xf32>,
    return
  }
  func.func @transform_0(%arg0: i32) -> (i32, i32) {
    %c0_i32 = arith.constant 0 : i32
    %c0_i32_0 = arith.constant 0 : i32
    return %arg0, %c0_i32 : i32, i32
  }
  func.func @transform_1(%arg0: i32) -> (i32, i32) {
    %c0_i32 = arith.constant 0 : i32
    %c0_i32_0 = arith.constant 0 : i32
    %c0_i32_1 = arith.constant 0 : i32
    return %c0_i32, %c0_i32_0 : i32, i32
  }
  func.func @transform_2(%arg0: i32) -> (i32, i32) {
    %c0_i32 = arith.constant 0 : i32
    %c0_i32_0 = arith.constant 0 : i32
    %c0_i32_1 = arith.constant 0 : i32
    return %c0_i32, %c0_i32_0 : i32, i32
  }
  func.func @transform_3(%arg0: i32) -> (i32, i32) {
    %c0_i32 = arith.constant 0 : i32
    %c0_i32_0 = arith.constant 0 : i32
    return %arg0, %c0_i32 : i32, i32
  }
}

</mosaic_0001>

<llo_original>
// kernel: vprtempo_forward.1
$region0: #{vprtempo_forward.1}
  #allocation0 [shape = 'u32[]', space=smem, size = 0x4, offset = 0x4, fixed_abs, tag = 'smem constant byte address 0x4 - core index']
  #allocation1 [shape = 'u32[144,128]{1,0:T(1,128)}', space=vmem, size = 0x12000, scoped, tag = 'internal scratch']
  %s0 = inlined_call_operand.vmem [shape: bf16[32,128], index: 0, kind: input, shape index: {}]
  %s1 = inlined_call_operand.vmem [shape: bf16[128,128], index: 1, kind: input, shape index: {}]
  %s2 = inlined_call_operand.vmem [shape: bf16[128,128], index: 2, kind: input, shape index: {}]
  %s3 = inlined_call_operand.hbm [shape: f32[32,128], index: 3, kind: output, shape index: {}]
  %s4 = sld [smem:[#allocation0]]
  $region45: #{vprtempo_forward.1} parent=0
    _
  %s6 = ssub.s32 1, %s4
  %s7 = scalar_select 0, %s6, %s4
  $region1: #{vprtempo_forward.1} parent=0
    #allocation2 [shape = 'u8[16384]{0}', space=vmem, size = 0x4000, scoped, tag = 'output window, operand 0']
    #allocation3 [shape = 's32[2]{0}', space=sflag, size = 0x8, scoped, tag = 'scoped memory for vprtempo_forward.1']
    %8 = vsyncpa [#allocation3], 0
    %s9 = scalar_lea.sflag [#allocation3], 1
    %10 = vsyncpa %s9, 0
    loop: start=0, step=1, limit=4
    $region2: #{vprtempo_forward.1} parent=1 // loop_pre_header
      _
    $region3: #{vprtempo_forward.1} parent=1 // loop_header
      %s12 = sphi 0, %s16
      %p13 = scmp.ge.s32.totalorder %s12, 4
      %s22 = sphi 0, %s24
      %s25 = sphi 0, %s22
      %s26 = sphi 0, %s25
      %s42 = sphi 0, %s26
      %s46 = sphi 0, %s46
      %s48 = sphi 0, %s46
      %s49 = sphi 0, %s48
      %s63 = sphi 0, %s49
      %s67 = sphi 0, %s67
      %s69 = sphi 0, %s67
      %s70 = sphi 0, %s69
      %s84 = sphi 0, %s70
      %s90 = sphi 0, %s92
      %s93 = sphi 0, %s90
      %s94 = sphi 0, %s93
      %s110 = sphi 0, %s94
    $region4: #{vprtempo_forward.1} parent=1 // loop_header_branch
      %15 = sbr.rel (%p13) target = $region8
    $region5: #{vprtempo_forward.1} parent=1 // loop_body
      %s17 = ssub.s32 %s12, 1
      %s18 = ssub.s32 %s12, 2
      %s19 = sadd.s32 %s12, 1
      %s20 = ssub.s32 %s12, %s19
      %p21 = scmp.eq.s32.totalorder %s20, 0
      %s23 = sadd.s32 %s22, 1
      %s24 = scalar_select %p21, %s22, %s23
      %p27 = pneg %p21
      %p28 = scmp.eq.s32.totalorder %s12, 1
      %p29 = por %p27, %p28
      %p30 = scmp.ne.s32.totalorder %s22, %s25
      %p31 = scmp.eq.s32.totalorder %s12, 0
      %p32 = por %p30, %p31
      %p33 = scmp.ne.s32.totalorder %s22, %s25
      %p34 = scmp.eq.s32.totalorder %s17, 1
      %p35 = por %p33, %p34
      %p36 = scmp.ne.s32.totalorder %s25, %s26
      %p37 = scmp.eq.s32.totalorder %s17, 0
      %p38 = por %p36, %p37
      %p39 = scmp.ne.s32.totalorder %s25, %s26
      %p40 = scmp.eq.s32.totalorder %s18, 1
      %p41 = por %p39, %p40
      %p43 = scmp.ne.s32.totalorder %s26, %s42
      %p44 = scmp.eq.s32.totalorder %s18, 0
      %p45 = por %p43, %p44
      %s47 = sadd.s32 %s46, 1
      %p50 = scmp.eq.s32.totalorder %s12, 1
      %p51 = scmp.ne.s32.totalorder %s46, %s48
      %p52 = scmp.eq.s32.totalorder %s12, 0
      %p53 = por %p51, %p52
      %p54 = scmp.ne.s32.totalorder %s46, %s48
      %p55 = scmp.eq.s32.totalorder %s17, 1
      %p56 = por %p54, %p55
      %p57 = scmp.ne.s32.totalorder %s48, %s49
      %p58 = scmp.eq.s32.totalorder %s17, 0
      %p59 = por %p57, %p58
      %p60 = scmp.ne.s32.totalorder %s48, %s49
      %p61 = scmp.eq.s32.totalorder %s18, 1
      %p62 = por %p60, %p61
      %p64 = scmp.ne.s32.totalorder %s49, %s63
      %p65 = scmp.eq.s32.totalorder %s18, 0
      %p66 = por %p64, %p65
      %s68 = sadd.s32 %s67, 1
      %p71 = scmp.eq.s32.totalorder %s12, 1
      %p72 = scmp.ne.s32.totalorder %s67, %s69
      %p73 = scmp.eq.s32.totalorder %s12, 0
      %p74 = por %p72, %p73
      %p75 = scmp.ne.s32.totalorder %s67, %s69
      %p76 = scmp.eq.s32.totalorder %s17, 1
      %p77 = por %p75, %p76
      %p78 = scmp.ne.s32.totalorder %s69, %s70
      %p79 = scmp.eq.s32.totalorder %s17, 0
      %p80 = por %p78, %p79
      %p81 = scmp.ne.s32.totalorder %s69, %s70
      %p82 = scmp.eq.s32.totalorder %s18, 1
      %p83 = por %p81, %p82
      %p85 = scmp.ne.s32.totalorder %s70, %s84
      %p86 = scmp.eq.s32.totalorder %s18, 0
      %p87 = por %p85, %p86
      %s88 = ssub.s32 %s12, %s19
      %p89 = scmp.eq.s32.totalorder %s88, 0
      %s91 = sadd.s32 %s90, 1
      %s92 = scalar_select %p89, %s90, %s91
      %p95 = pneg %p89
      %p96 = scmp.eq.s32.totalorder %s12, 1
      %p97 = por %p95, %p96
      %p98 = scmp.ne.s32.totalorder %s90, %s93
      %p99 = scmp.eq.s32.totalorder %s12, 0
      %p100 = por %p98, %p99
      %p101 = scmp.ne.s32.totalorder %s90, %s93
      %p102 = scmp.eq.s32.totalorder %s17, 1
      %p103 = por %p101, %p102
      %p104 = scmp.ne.s32.totalorder %s93, %s94
      %p105 = scmp.eq.s32.totalorder %s17, 0
      %p106 = por %p104, %p105
      %p107 = scmp.ne.s32.totalorder %s93, %s94
      %p108 = scmp.eq.s32.totalorder %s18, 1
      %p109 = por %p107, %p108
      %p111 = scmp.ne.s32.totalorder %s94, %s110
      %p112 = scmp.eq.s32.totalorder %s18, 0
      %p113 = por %p111, %p112
      %p114 = scmp.le.s32.totalorder 1, %s12
      %p115 = scmp.lt.s32.totalorder %s12, 3
      %p116 = pnand %p114, %p115
      %p117 = pneg %p116
      // Predicated region
      $region9: #{vprtempo_forward.1} parent=5 // pred_check
        _
      $region10: #{vprtempo_forward.1} parent=5 // pred_check_branch
        %119 = sbr.rel (%p116) target = $region12
      $region11: #{vprtempo_forward.1} parent=5 // pred_region
        %s120 = ssub.s32 %s12, 1
        // Predicated region
        $region13: #{vprtempo_forward.1} parent=11 // pred_check
          %p121 = pneg %p59
        $region14: #{vprtempo_forward.1} parent=11 // pred_check_branch
          %123 = sbr.rel (%p121) target = $region16
        $region15: #{vprtempo_forward.1} parent=11 // pred_region
          _
        $region16: #{vprtempo_forward.1} parent=11 // pred_fallthru
          _
        // Predicated region
        $region17: #{vprtempo_forward.1} parent=11 // pred_check
          %p124 = pneg %p80
        $region18: #{vprtempo_forward.1} parent=11 // pred_check_branch
          %126 = sbr.rel (%p124) target = $region20
        $region19: #{vprtempo_forward.1} parent=11 // pred_region
          _
        $region20: #{vprtempo_forward.1} parent=11 // pred_fallthru
          _
      $region12: #{vprtempo_forward.1} parent=5 // pred_fallthru
        _
      %p127 = scmp.lt.s32.totalorder %s12, 2
      // Predicated region
      $region21: #{vprtempo_forward.1} parent=5 // pred_check
        %p128 = pneg %p127
      $region22: #{vprtempo_forward.1} parent=5 // pred_check_branch
        %130 = sbr.rel (%p128) target = $region24
      $region23: #{vprtempo_forward.1} parent=5 // pred_region
        // Predicated region
        $region25: #{vprtempo_forward.1} parent=23 // pred_check
          %p131 = pneg %p32
        $region26: #{vprtempo_forward.1} parent=23 // pred_check_branch
          %133 = sbr.rel (%p131) target = $region28
        $region27: #{vprtempo_forward.1} parent=23 // pred_region
          %s134 = smul.u32 2, %s12
          %p135 = scmp.lt.s32.totalorder %s134, 3
          %s136 = scalar_select %p135, %s134, 3
          %s137 = smul.addr %s136, 4
          %s138 = scalar_lea.vmem %s0, %s137
          %s139 = smul.u32 2, %s12
        $region28: #{vprtempo_forward.1} parent=23 // pred_fallthru
          _
      $region24: #{vprtempo_forward.1} parent=5 // pred_fallthru
        _
      %p140 = scmp.le.s32.totalorder 1, %s12
      %p141 = scmp.lt.s32.totalorder %s12, 3
      %p142 = pnand %p140, %p141
      %p143 = pneg %p142
      // Predicated region
      $region29: #{vprtempo_forward.1} parent=5 // pred_check
        _
      $region30: #{vprtempo_forward.1} parent=5 // pred_check_branch
        %145 = sbr.rel (%p142) target = $region32
      $region31: #{vprtempo_forward.1} parent=5 // pred_region
        %s146 = ssub.s32 %s12, 1
        %s147 = smul.u32 2, %s17
        %p148 = scmp.lt.s32.totalorder %s147, 3
        %s149 = scalar_select %p148, %s147, 3
        %s150 = smul.addr %s149, 4
        %s151 = scalar_lea.vmem %s0, %s150
        %p152 = pneg %p38
        %p153 = pneg %p35
        %p154 = pneg %p59
        %p155 = pneg %p56
        %p156 = pneg %p80
        %p157 = pneg %p77
        %p158 = pneg %p106
        %p159 = pneg %p103
        %s160 = sand.u32 %s93, 1
        %s161 = scalar_lea.sflag [#allocation3], %s160
        %s162 = sand.u32 %s93, 1
        %s163 = smul.addr %s162, 16
        %s164 = scalar_lea.vmem [#allocation2], %s163
        %s165 = smul.u32 2, %s17
        %p166 = scmp.lt.s32.totalorder %s165, 3
        %s167 = scalar_select %p166, %s165, 3
        %s168 = smul.addr %s167, 4
        %s169 = scalar_lea.vmem %s0, %s168
        %s170 = smul.u32 2, %s17
        %s171 = smul.u32 2, %s17
        %v173 = vld [vmem:[%s169] sm:$0xf]
        %v174 = vld [vmem:[%s169 + $0x4] sm:$0xf]
        %v175 = vld [vmem:[%s1] sm:$0xf]
        %v176 = vld [vmem:[%s1 + $0x4] sm:$0xf]
        %v177 = vld [vmem:[%s1 + $0x8] sm:$0xf]
        %v178 = vld [vmem:[%s1 + $0xc] sm:$0xf]
        %v179 = vld [vmem:[%s1 + $0x10] sm:$0xf]
        %v180 = vld [vmem:[%s1 + $0x14] sm:$0xf]
        %v181 = vld [vmem:[%s1 + $0x18] sm:$0xf]
        %v182 = vld [vmem:[%s1 + $0x1c] sm:$0xf]
        %v183 = vld [vmem:[%s1 + $0x20] sm:$0xf]
        %v184 = vld [vmem:[%s1 + $0x24] sm:$0xf]
        %v185 = vld [vmem:[%s1 + $0x28] sm:$0xf]
        %v186 = vld [vmem:[%s1 + $0x2c] sm:$0xf]
        %v187 = vld [vmem:[%s1 + $0x30] sm:$0xf]
        %v188 = vld [vmem:[%s1 + $0x34] sm:$0xf]
        %v189 = vld [vmem:[%s1 + $0x38] sm:$0xf]
        %v190 = vld [vmem:[%s1 + $0x3c] sm:$0xf]
        %v193 = vunpack.c.l.b16 %v173
        %v194 = vunpack.c.l.b16 %v174
        %v195 = vpack.c.b16 %v194, %v193
        %v213 = vunpack.c.l.b16 %v175
        %v214 = vunpack.c.l.b16 %v176
        %v215 = vunpack.c.l.b16 %v177
        %v216 = vunpack.c.l.b16 %v178
        %v217 = vunpack.c.l.b16 %v179
        %v218 = vunpack.c.l.b16 %v180
        %v219 = vunpack.c.l.b16 %v181
        %v220 = vunpack.c.l.b16 %v182
        %v221 = vunpack.c.l.b16 %v183
        %v222 = vunpack.c.l.b16 %v184
        %v223 = vunpack.c.l.b16 %v185
        %v224 = vunpack.c.l.b16 %v186
        %v225 = vunpack.c.l.b16 %v187
        %v226 = vunpack.c.l.b16 %v188
        %v227 = vunpack.c.l.b16 %v189
        %v228 = vunpack.c.l.b16 %v190
        %v229 = vpack.c.b16 %v214, %v213
        %v230 = vpack.c.b16 %v216, %v215
        %v231 = vpack.c.b16 %v218, %v217
        %v232 = vpack.c.b16 %v220, %v219
        %v233 = vpack.c.b16 %v222, %v221
        %v234 = vpack.c.b16 %v224, %v223
        %v235 = vpack.c.b16 %v226, %v225
        %v236 = vpack.c.b16 %v228, %v227
        %245 = vmatprep.subr.bf16.mxu0 0
        %246 = vmatpush1.bf16.msra.mxu0 %v229
        %247 = vmatprep.subr.bf16.mxu0 0
        %248 = vmatpush1.bf16.msra.mxu0 %v230
        %249 = vmatprep.subr.bf16.mxu0 0
        %250 = vmatpush1.bf16.msra.mxu0 %v231
        %251 = vmatprep.subr.bf16.mxu0 0
        %252 = vmatpush1.bf16.msra.mxu0 %v232
        %253 = vmatprep.subr.bf16.mxu0 0
        %254 = vmatpush1.bf16.msra.mxu0 %v233
        %255 = vmatprep.subr.bf16.mxu0 0
        %256 = vmatpush1.bf16.msra.mxu0 %v234
        %257 = vmatprep.subr.bf16.mxu0 0
        %258 = vmatpush1.bf16.msra.mxu0 %v235
        %259 = vmatprep.subr.bf16.mxu0 0
        %260 = vmatpush1.bf16.msra.mxu0 %v236
        %261 = vmatprep.subr.bf16.mxu0 0
        %262 = vmatpush1.bf16.msra.mxu0 0
        %263 = vmatprep.subr.bf16.mxu0 0
        %264 = vmatpush1.bf16.msra.mxu0 0
        %265 = vmatprep.subr.bf16.mxu0 0
        %266 = vmatpush1.bf16.msra.mxu0 0
        %267 = vmatprep.subr.bf16.mxu0 0
        %268 = vmatpush1.bf16.msra.mxu0 0
        %269 = vmatprep.subr.bf16.mxu0 0
        %270 = vmatpush1.bf16.msra.mxu0 0
        %271 = vmatprep.subr.bf16.mxu0 0
        %272 = vmatpush1.bf16.msra.mxu0 0
        %273 = vmatprep.subr.bf16.mxu0 0
        %274 = vmatpush1.bf16.msra.mxu0 0
        %275 = vmatprep.subr.bf16.mxu0 0
        %276 = vmatpush1.bf16.msra.mxu0 0
        %277 = vmatprep.mubr.bf16.mxu0 0
        %278 = vmatmul.mubr.bf16.gmra.mrb[0].mxu0 %v195
        %v279 = vpop.f32.mrb[0].mxu0
        %v280 = vadd.f32 0.0, %v279
        %v281 = vpop.f32.mrb[0].mxu0
        %v282 = vpop.f32.mrb[0].mxu0
        %v283 = vadd.f32 0.0, %v282
        %v284 = vpop.f32.mrb[0].mxu0
        %285 = vdwg.mxu0
        %vm286 = vcmp.ge.f32.partialorder %v280, 1.0
        %vm287 = vcmp.ge.f32.partialorder %v283, 1.0
        %v288 = vsel %vm286, 1, 0
        %v289 = vsel %vm287, 1, 0
        %v290 = vcvt.s32.f32 %v288
        %v291 = vcvt.s32.f32 %v289
        %v292 = vpack.c.bf16 %v291, %v290
        %v293 = vld [vmem:[%s2] sm:$0xf]
        %v294 = vld [vmem:[%s2 + $0x4] sm:$0xf]
        %v295 = vld [vmem:[%s2 + $0x8] sm:$0xf]
        %v296 = vld [vmem:[%s2 + $0xc] sm:$0xf]
        %v297 = vld [vmem:[%s2 + $0x10] sm:$0xf]
        %v298 = vld [vmem:[%s2 + $0x14] sm:$0xf]
        %v299 = vld [vmem:[%s2 + $0x18] sm:$0xf]
        %v300 = vld [vmem:[%s2 + $0x1c] sm:$0xf]
        %v301 = vld [vmem:[%s2 + $0x20] sm:$0xf]
        %v302 = vld [vmem:[%s2 + $0x24] sm:$0xf]
        %v303 = vld [vmem:[%s2 + $0x28] sm:$0xf]
        %v304 = vld [vmem:[%s2 + $0x2c] sm:$0xf]
        %v305 = vld [vmem:[%s2 + $0x30] sm:$0xf]
        %v306 = vld [vmem:[%s2 + $0x34] sm:$0xf]
        %v307 = vld [vmem:[%s2 + $0x38] sm:$0xf]
        %v308 = vld [vmem:[%s2 + $0x3c] sm:$0xf]
        %v325 = vunpack.c.l.b16 %v293
        %v326 = vunpack.c.l.b16 %v294
        %v327 = vunpack.c.l.b16 %v295
        %v328 = vunpack.c.l.b16 %v296
        %v329 = vunpack.c.l.b16 %v297
        %v330 = vunpack.c.l.b16 %v298
        %v331 = vunpack.c.l.b16 %v299
        %v332 = vunpack.c.l.b16 %v300
        %v333 = vunpack.c.l.b16 %v301
        %v334 = vunpack.c.l.b16 %v302
        %v335 = vunpack.c.l.b16 %v303
        %v336 = vunpack.c.l.b16 %v304
        %v337 = vunpack.c.l.b16 %v305
        %v338 = vunpack.c.l.b16 %v306
        %v339 = vunpack.c.l.b16 %v307
        %v340 = vunpack.c.l.b16 %v308
        %v341 = vpack.c.b16 %v326, %v325
        %v342 = vpack.c.b16 %v328, %v327
        %v343 = vpack.c.b16 %v330, %v329
        %v344 = vpack.c.b16 %v332, %v331
        %v345 = vpack.c.b16 %v334, %v333
        %v346 = vpack.c.b16 %v336, %v335
        %v347 = vpack.c.b16 %v338, %v337
        %v348 = vpack.c.b16 %v340, %v339
        %357 = vmatprep.subr.bf16.mxu0 0
        %358 = vmatpush1.bf16.msra.mxu0 %v341
        %359 = vmatprep.subr.bf16.mxu0 0
        %360 = vmatpush1.bf16.msra.mxu0 %v342
        %361 = vmatprep.subr.bf16.mxu0 0
        %362 = vmatpush1.bf16.msra.mxu0 %v343
        %363 = vmatprep.subr.bf16.mxu0 0
        %364 = vmatpush1.bf16.msra.mxu0 %v344
        %365 = vmatprep.subr.bf16.mxu0 0
        %366 = vmatpush1.bf16.msra.mxu0 %v345
        %367 = vmatprep.subr.bf16.mxu0 0
        %368 = vmatpush1.bf16.msra.mxu0 %v346
        %369 = vmatprep.subr.bf16.mxu0 0
        %370 = vmatpush1.bf16.msra.mxu0 %v347
        %371 = vmatprep.subr.bf16.mxu0 0
        %372 = vmatpush1.bf16.msra.mxu0 %v348
        %373 = vmatprep.subr.bf16.mxu0 0
        %374 = vmatpush1.bf16.msra.mxu0 0
        %375 = vmatprep.subr.bf16.mxu0 0
        %376 = vmatpush1.bf16.msra.mxu0 0
        %377 = vmatprep.subr.bf16.mxu0 0
        %378 = vmatpush1.bf16.msra.mxu0 0
        %379 = vmatprep.subr.bf16.mxu0 0
        %380 = vmatpush1.bf16.msra.mxu0 0
        %381 = vmatprep.subr.bf16.mxu0 0
        %382 = vmatpush1.bf16.msra.mxu0 0
        %383 = vmatprep.subr.bf16.mxu0 0
        %384 = vmatpush1.bf16.msra.mxu0 0
        %385 = vmatprep.subr.bf16.mxu0 0
        %386 = vmatpush1.bf16.msra.mxu0 0
        %387 = vmatprep.subr.bf16.mxu0 0
        %388 = vmatpush1.bf16.msra.mxu0 0
        %389 = vmatprep.mubr.bf16.mxu0 0
        %390 = vmatmul.mubr.bf16.gmra.mrb[0].mxu0 %v292
        %v391 = vpop.f32.mrb[0].mxu0
        %v392 = vadd.f32 0.0, %v391
        %v393 = vpop.f32.mrb[0].mxu0
        %v394 = vpop.f32.mrb[0].mxu0
        %v395 = vadd.f32 0.0, %v394
        %v396 = vpop.f32.mrb[0].mxu0
        %397 = vdwg.mxu0
        %vm398 = vcmp.ge.f32.partialorder %v392, 1.0
        %vm399 = vcmp.ge.f32.partialorder %v395, 1.0
        %v400 = vsel %vm398, 1, 0
        %v401 = vsel %vm399, 1, 0
        %v402 = vcvt.s32.f32 %v400
        %v403 = vcvt.s32.f32 %v401
        %404 = vst [vmem:[%s164] sm:$0xff] %v402
        %405 = vst [vmem:[%s164 + $0x8] sm:$0xff] %v403
        %s406 = sand.u32 %s93, 1
        %s407 = scalar_lea.sflag [#allocation3], %s406
        %s408 = sand.u32 %s93, 1
        %s409 = smul.addr %s408, 16
        %s410 = scalar_lea.vmem [#allocation2], %s409
        // Predicated region
        $region33: #{vprtempo_forward.1} parent=31 // pred_check
          %p411 = pneg %p103
        $region34: #{vprtempo_forward.1} parent=31 // pred_check_branch
          %413 = sbr.rel (%p411) target = $region36
        $region35: #{vprtempo_forward.1} parent=31 // pred_region
          %s414 = smul.u32 2, %s17
          %s416 = ssub.s32 256, 256
          %417 = vsyncadd %s407, %s416
          %s418 = smul.addr %s414, 128
          %s419 = scalar_lea.hbm %s3, %s418
          %s420 = sshll.u32 %s410, 4
          %s421 = int_to_ptr.vmem [resolvable:$true] %s420
          %426 = dma.vmem_to_hbm [thread:$0]  %s421, 256, %s419, %s407, 128, 128, 8
        $region36: #{vprtempo_forward.1} parent=31 // pred_fallthru
          _
      $region32: #{vprtempo_forward.1} parent=5 // pred_fallthru
        _
      %p427 = scmp.le.s32.totalorder 2, %s12
      // Predicated region
      $region37: #{vprtempo_forward.1} parent=5 // pred_check
        %p428 = pneg %p427
      $region38: #{vprtempo_forward.1} parent=5 // pred_check_branch
        %430 = sbr.rel (%p428) target = $region40
      $region39: #{vprtempo_forward.1} parent=5 // pred_region
        %s431 = ssub.s32 %s12, 2
        // Predicated region
        $region41: #{vprtempo_forward.1} parent=39 // pred_check
          %p432 = pneg %p109
        $region42: #{vprtempo_forward.1} parent=39 // pred_check_branch
          %434 = sbr.rel (%p432) target = $region44
        $region43: #{vprtempo_forward.1} parent=39 // pred_region
          %s435 = sand.u32 %s94, 1
          %s436 = scalar_lea.sflag [#allocation3], %s435
          %s437 = sand.u32 %s94, 1
          %s438 = smul.addr %s437, 16
          %s439 = scalar_lea.vmem [#allocation2], %s438
          %440 = dma.done %s436, 256
        $region44: #{vprtempo_forward.1} parent=39 // pred_fallthru
          _
      $region40: #{vprtempo_forward.1} parent=5 // pred_fallthru
        _
    $region6: #{vprtempo_forward.1} parent=1 // loop_footer
      %s16 = sadd.s32 1, %s12
    $region7: #{vprtempo_forward.1} parent=1 // loop_footer_branch
      %11 = sbr.rel target = $region3
    $region8: #{vprtempo_forward.1} parent=1 // loop_exit
      _
    %441 = vsyncpa [#allocation3], 1
    %s442 = scalar_lea.sflag [#allocation3], 1
    %443 = vsyncpa %s442, 1

</llo_original>
